<compile_context>
chip_gen: v7x
topology: tpu7x:2x2x1
jax: 0.10.0
libtpu: 0.0.40
codegen_flags: <defaults>
</compile_context>

<pallas_src>
import functools

import jax
import jax.numpy as jnp
from jax.experimental import pallas as pl
from jax.experimental.pallas import tpu as pltpu

_LANE = 128


def _round_up(x, m):
    return ((x + m - 1) // m) * m


def mlp_kernel(x_ref, w1_ref, b1_ref, w2_ref, b2_ref, w3_ref, b3_ref, o_ref):
    # bf16 operands on the MXU, f32 accumulation, f32 bias-add/ReLU on the VPU.
    x = x_ref[...].astype(jnp.bfloat16)

    h1 = jnp.dot(x, w1_ref[...].astype(jnp.bfloat16),
                 preferred_element_type=jnp.float32) + b1_ref[...]
    h1 = jnp.maximum(h1, 0.0)

    h2 = jnp.dot(h1.astype(jnp.bfloat16), w2_ref[...].astype(jnp.bfloat16),
                 preferred_element_type=jnp.float32) + b2_ref[...]
    h2 = jnp.maximum(h2, 0.0)

    h3 = jnp.dot(h2.astype(jnp.bfloat16), w3_ref[...].astype(jnp.bfloat16),
                 preferred_element_type=jnp.float32) + b3_ref[...]

    o_ref[...] = h3.astype(o_ref.dtype)


@functools.partial(jax.jit, static_argnames=("tile_b",))
def mlp_forward(x, params, *, tile_b=256):
    w1, b1, w2, b2, w3, b3 = params
    batch, in_size = x.shape
    hidden = w1.shape[1]
    out_size = w3.shape[1]

    # Lane-dense logits: pad the output feature dim to a multiple of 128 lanes.
    # Padded columns of w3/b3 are zero, so the extra logits are zero and sliced off.
    out_pad = _round_up(max(out_size, _LANE), _LANE)
    w3p = jnp.pad(w3, ((0, 0), (0, out_pad - out_size)))
    b3p = jnp.pad(b3, ((0, 0), (0, out_pad - out_size)))

    # Batch tiling: 8-aligned tile, batch padded to a multiple of the tile.
    tb = min(tile_b, _round_up(batch, 8))
    b_padded = _round_up(batch, tb)
    if b_padded != batch:
        x = jnp.pad(x, ((0, b_padded - batch), (0, 0)))
    grid = (b_padded // tb,)

    resident = lambda shape: pl.BlockSpec(shape, lambda i: (0, 0))  # stays in VMEM

    out = pl.pallas_call(
        mlp_kernel,
        out_shape=jax.ShapeDtypeStruct((b_padded, out_pad), jnp.float32),
        grid=grid,
        in_specs=[
            pl.BlockSpec((tb, in_size), lambda i: (i, 0)),   # x streams over batch
            resident(w1.shape), resident(b1.shape),
            resident(w2.shape), resident(b2.shape),
            resident(w3p.shape), resident(b3p.shape),
        ],
        out_specs=pl.BlockSpec((tb, out_pad), lambda i: (i, 0)),
        compiler_params=pltpu.CompilerParams(
            dimension_semantics=("parallel",),   # 2x on v7x (2 TCs); harmless elsewhere
        ),
    )(x, w1, b1, w2, b2, w3p, b3p)

    return out[:batch, :out_size]


def init_params(key, input_size, hidden_size, output_size):
    # PyTorch nn.Linear-style U(-1/sqrt(fan_in), 1/sqrt(fan_in)) init.
    # Weights stored as (in_features, out_features) = W.T relative to PyTorch.
    ks = jax.random.split(key, 6)

    def linear(kw, kb, fan_in, fan_out):
        bound = 1.0 / jnp.sqrt(fan_in)
        w = jax.random.uniform(kw, (fan_in, fan_out), jnp.float32, -bound, bound)
        b = jax.random.uniform(kb, (1, fan_out), jnp.float32, -bound, bound)
        return w, b

    w1, b1 = linear(ks[0], ks[1], input_size, hidden_size)
    w2, b2 = linear(ks[2], ks[3], hidden_size, hidden_size)
    w3, b3 = linear(ks[4], ks[5], hidden_size, output_size)
    return (w1, b1, w2, b2, w3, b3)


def _ref_forward(x, params, mxu_dtype):
    # Pure-JAX reference with the same per-layer precision choices as the kernel.
    w1, b1, w2, b2, w3, b3 = params

    def lin(a, w, b):
        return jnp.dot(a.astype(mxu_dtype), w.astype(mxu_dtype),
                       preferred_element_type=jnp.float32) + b

    h = jnp.maximum(lin(x, w1, b1), 0.0)
    h = jnp.maximum(lin(h, w2, b2), 0.0)
    return lin(h, w3, b3)


if __name__ == "__main__":
    key = jax.random.PRNGKey(0)
    k_x, k_p = jax.random.split(key)

    input_size = 32    # e.g. one-hot-encoded mushroom features
    hidden_size = 64
    output_size = 2    # binary classification logits

    params = init_params(k_p, input_size, hidden_size, output_size)

    for batch in (8, 5):   # 5 exercises the batch-padding path
        x = jax.random.normal(k_x, (batch, input_size), jnp.float32)

        out = mlp_forward(x, params)
        out = jax.block_until_ready(out)
        assert out.shape == (batch, output_size)

        # Tight check vs a precision-matched (bf16 MXU, f32 accum) reference.
        ref_bf16 = _ref_forward(x, params, jnp.bfloat16)
        assert jnp.allclose(out, ref_bf16, atol=1e-3, rtol=1e-3), (
            "mismatch vs bf16-matched reference")

        # Loose sanity check vs full-f32 reference (bf16 MXU rounding).
        ref_f32 = _ref_forward(x, params, jnp.float32)
        assert jnp.allclose(out, ref_f32, atol=5e-2, rtol=5e-2), (
            "mismatch vs f32 reference")

    print("KERNEL_OK")
</pallas_src>

<mosaic_0001>
module attributes {stable_mosaic.version = 11 : i64} {
  func.func @mlp_kernel(%arg0: i32, %arg1: memref<8x32xf32, #tpu.memory_space<vmem>>, %arg2: memref<32x64xf32, #tpu.memory_space<vmem>>, %arg3: memref<1x64xf32, #tpu.memory_space<vmem>>, %arg4: memref<64x64xf32, #tpu.memory_space<vmem>>, %arg5: memref<1x64xf32, #tpu.memory_space<vmem>>, %arg6: memref<64x128xf32, #tpu.memory_space<vmem>>, %arg7: memref<1x128xf32, #tpu.memory_space<vmem>>, %arg8: memref<8x128xf32, #tpu.memory_space<vmem>>) attributes {dimension_semantics = [#tpu.dimension_semantics<parallel>], iteration_bounds = array<i64: 1>, scalar_prefetch = 0 : i64, scratch_operands = 0 : i64, tpu.core_type = #tpu.core_type<tc>, window_params = [{transform_indices = @transform_0, window_bounds = array<i64: 8, 32>}, {pipeline_mode = #tpu.pipeline_mode<synchronous>, transform_indices = @transform_1, window_bounds = array<i64: 32, 64>}, {pipeline_mode = #tpu.pipeline_mode<synchronous>, transform_indices = @transform_2, window_bounds = array<i64: 1, 64>}, {pipeline_mode = #tpu.pipeline_mode<synchronous>, transform_indices = @transform_3, window_bounds = array<i64: 64, 64>}, {pipeline_mode = #tpu.pipeline_mode<synchronous>, transform_indices = @transform_4, window_bounds = array<i64: 1, 64>}, {pipeline_mode = #tpu.pipeline_mode<synchronous>, transform_indices = @transform_5, window_bounds = array<i64: 64, 128>}, {pipeline_mode = #tpu.pipeline_mode<synchronous>, transform_indices = @transform_6, window_bounds = array<i64: 1, 128>}, {transform_indices = @transform_7, window_bounds = array<i64: 8, 128>}]} {
    %c0 = arith.constant 0 : index
    %c0_0 = arith.constant 0 : index
    %0 = vector.load %arg1[%c0, %c0_0] : memref<8x32xf32, #tpu.memory_space<vmem>>, vector<8x32xf32>
    %1 = arith.truncf %0 : vector<8x32xf32> to vector<8x32xbf16>
    %c0_1 = arith.constant 0 : index
    %c0_2 = arith.constant 0 : index
    %2 = vector.load %arg2[%c0_1, %c0_2] : memref<32x64xf32, #tpu.memory_space<vmem>>, vector<32x64xf32>
    %3 = arith.truncf %2 : vector<32x64xf32> to vector<32x64xbf16>
    %cst = arith.constant dense<0.000000e+00> : vector<8x64xf32>
    %4 = tpu.matmul %1, %3, %cst {dimension_numbers = #tpu.dot_dimension_numbers<[1], [0], [0], [1], [0, 0, 1, 1], [], []>} : vector<8x32xbf16>, vector<32x64xbf16>, vector<8x64xf32> -> vector<8x64xf32>
    %c0_3 = arith.constant 0 : index
    %c0_4 = arith.constant 0 : index
    %5 = vector.load %arg3[%c0_3, %c0_4] : memref<1x64xf32, #tpu.memory_space<vmem>>, vector<1x64xf32>
    %6 = vector.broadcast %5 : vector<1x64xf32> to vector<8x64xf32>
    %7 = arith.addf %4, %6 : vector<8x64xf32>
    %cst_5 = arith.constant 0.000000e+00 : f32
    %8 = vector.broadcast %cst_5 : f32 to vector<8x64xf32>
    %9 = arith.maximumf %7, %8 : vector<8x64xf32>
    %10 = arith.truncf %9 : vector<8x64xf32> to vector<8x64xbf16>
    %c0_6 = arith.constant 0 : index
    %c0_7 = arith.constant 0 : index
    %11 = vector.load %arg4[%c0_6, %c0_7] : memref<64x64xf32, #tpu.memory_space<vmem>>, vector<64x64xf32>
    %12 = arith.truncf %11 : vector<64x64xf32> to vector<64x64xbf16>
    %cst_8 = arith.constant dense<0.000000e+00> : vector<8x64xf32>
    %13 = tpu.matmul %10, %12, %cst_8 {dimension_numbers = #tpu.dot_dimension_numbers<[1], [0], [0], [1], [0, 0, 1, 1], [], []>} : vector<8x64xbf16>, vector<64x64xbf16>, vector<8x64xf32> -> vector<8x64xf32>
    %c0_9 = arith.constant 0 : index
    %c0_10 = arith.constant 0 : index
    %14 = vector.load %arg5[%c0_9, %c0_10] : memref<1x64xf32, #tpu.memory_space<vmem>>, vector<1x64xf32>
    %15 = vector.broadcast %14 : vector<1x64xf32> to vector<8x64xf32>
    %16 = arith.addf %13, %15 : vector<8x64xf32>
    %cst_11 = arith.constant 0.000000e+00 : f32
    %17 = vector.broadcast %cst_11 : f32 to vector<8x64xf32>
    %18 = arith.maximumf %16, %17 : vector<8x64xf32>
    %19 = arith.truncf %18 : vector<8x64xf32> to vector<8x64xbf16>
    %c0_12 = arith.constant 0 : index
    %c0_13 = arith.constant 0 : index
    %20 = vector.load %arg6[%c0_12, %c0_13] : memref<64x128xf32, #tpu.memory_space<vmem>>, vector<64x128xf32>
    %21 = arith.truncf %20 : vector<64x128xf32> to vector<64x128xbf16>
    %cst_14 = arith.constant dense<0.000000e+00> : vector<8x128xf32>
    %22 = tpu.matmul %19, %21, %cst_14 {dimension_numbers = #tpu.dot_dimension_numbers<[1], [0], [0], [1], [0, 0, 1, 1], [], []>} : vector<8x64xbf16>, vector<64x128xbf16>, vector<8x128xf32> -> vector<8x128xf32>
    %c0_15 = arith.constant 0 : index
    %c0_16 = arith.constant 0 : index
    %23 = vector.load %arg7[%c0_15, %c0_16] : memref<1x128xf32, #tpu.memory_space<vmem>>, vector<1x128xf32>
    %24 = vector.broadcast %23 : vector<1x128xf32> to vector<8x128xf32>
    %25 = arith.addf %22, %24 : vector<8x128xf32>
    %c0_17 = arith.constant 0 : index
    %c0_18 = arith.constant 0 : index
    %26 = vector.load %arg8[%c0_17, %c0_18] : memref<8x128xf32, #tpu.memory_space<vmem>>, vector<8x128xf32>
    tpu.vector_store %arg8[%c0_17, %c0_18], %25 {strides = array<i32>} : memref<8x128xf32, #tpu.memory_space<vmem>>, vector<8x128xf32>,
    return
  }
  func.func @transform_0(%arg0: i32) -> (i32, i32) {
    %c0_i32 = arith.constant 0 : i32
    %c0_i32_0 = arith.constant 0 : i32
    return %arg0, %c0_i32 : i32, i32
  }
  func.func @transform_1(%arg0: i32) -> (i32, i32) {
    %c0_i32 = arith.constant 0 : i32
    %c0_i32_0 = arith.constant 0 : i32
    %c0_i32_1 = arith.constant 0 : i32
    return %c0_i32, %c0_i32_0 : i32, i32
  }
  func.func @transform_2(%arg0: i32) -> (i32, i32) {
    %c0_i32 = arith.constant 0 : i32
    %c0_i32_0 = arith.constant 0 : i32
    %c0_i32_1 = arith.constant 0 : i32
    return %c0_i32, %c0_i32_0 : i32, i32
  }
  func.func @transform_3(%arg0: i32) -> (i32, i32) {
    %c0_i32 = arith.constant 0 : i32
    %c0_i32_0 = arith.constant 0 : i32
    %c0_i32_1 = arith.constant 0 : i32
    return %c0_i32, %c0_i32_0 : i32, i32
  }
  func.func @transform_4(%arg0: i32) -> (i32, i32) {
    %c0_i32 = arith.constant 0 : i32
    %c0_i32_0 = arith.constant 0 : i32
    %c0_i32_1 = arith.constant 0 : i32
    return %c0_i32, %c0_i32_0 : i32, i32
  }
  func.func @transform_5(%arg0: i32) -> (i32, i32) {
    %c0_i32 = arith.constant 0 : i32
    %c0_i32_0 = arith.constant 0 : i32
    %c0_i32_1 = arith.constant 0 : i32
    return %c0_i32, %c0_i32_0 : i32, i32
  }
  func.func @transform_6(%arg0: i32) -> (i32, i32) {
    %c0_i32 = arith.constant 0 : i32
    %c0_i32_0 = arith.constant 0 : i32
    %c0_i32_1 = arith.constant 0 : i32
    return %c0_i32, %c0_i32_0 : i32, i32
  }
  func.func @transform_7(%arg0: i32) -> (i32, i32) {
    %c0_i32 = arith.constant 0 : i32
    %c0_i32_0 = arith.constant 0 : i32
    return %arg0, %c0_i32 : i32, i32
  }
}

</mosaic_0001>

<llo_original>
// kernel: mlp_forward.1
$region0: #{mlp_forward.1}
  #allocation0 [shape = 'u32[]', space=smem, size = 0x4, offset = 0x4, fixed_abs, tag = 'smem constant byte address 0x4 - core index']
  #allocation1 [shape = 'u32[144,128]{1,0:T(1,128)}', space=vmem, size = 0x12000, scoped, tag = 'internal scratch']
  %s0 = inlined_call_operand.vmem [shape: f32[8,32], index: 0, kind: input, shape index: {}]
  %s1 = inlined_call_operand.vmem [shape: f32[32,64], index: 1, kind: input, shape index: {}]
  %s2 = inlined_call_operand.vmem [shape: f32[1,64], index: 2, kind: input, shape index: {}]
  %s3 = inlined_call_operand.vmem [shape: f32[64,64], index: 3, kind: input, shape index: {}]
  %s4 = inlined_call_operand.vmem [shape: f32[1,64], index: 4, kind: input, shape index: {}]
  %s5 = inlined_call_operand.vmem [shape: f32[64,128], index: 5, kind: input, shape index: {}]
  %s6 = inlined_call_operand.vmem [shape: f32[1,128], index: 6, kind: input, shape index: {}]
  %s7 = inlined_call_operand.vmem [shape: f32[8,128], index: 7, kind: output, shape index: {}]
  %s8 = sld [smem:[#allocation0]]
  $region38: #{mlp_forward.1} parent=0
    _
  %s10 = ssub.s32 1, %s8
  %s11 = scalar_select 0, %s10, %s8
  // Predicated region
  $region2: #{mlp_forward.1} parent=0 // pred_check
    _
  $region3: #{mlp_forward.1} parent=0 // pred_check_branch
    %13 = sbr.rel (0) target = $region5
  $region4: #{mlp_forward.1} parent=0 // pred_region
    _
  $region5: #{mlp_forward.1} parent=0 // pred_fallthru
    _
  // Predicated region
  $region6: #{mlp_forward.1} parent=0 // pred_check
    _
  $region7: #{mlp_forward.1} parent=0 // pred_check_branch
    %15 = sbr.rel (0) target = $region9
  $region8: #{mlp_forward.1} parent=0 // pred_region
    _
  $region9: #{mlp_forward.1} parent=0 // pred_fallthru
    _
  // Predicated region
  $region10: #{mlp_forward.1} parent=0 // pred_check
    _
  $region11: #{mlp_forward.1} parent=0 // pred_check_branch
    %17 = sbr.rel (0) target = $region13
  $region12: #{mlp_forward.1} parent=0 // pred_region
    _
  $region13: #{mlp_forward.1} parent=0 // pred_fallthru
    _
  // Predicated region
  $region14: #{mlp_forward.1} parent=0 // pred_check
    _
  $region15: #{mlp_forward.1} parent=0 // pred_check_branch
    %19 = sbr.rel (0) target = $region17
  $region16: #{mlp_forward.1} parent=0 // pred_region
    _
  $region17: #{mlp_forward.1} parent=0 // pred_fallthru
    _
  // Predicated region
  $region18: #{mlp_forward.1} parent=0 // pred_check
    _
  $region19: #{mlp_forward.1} parent=0 // pred_check_branch
    %21 = sbr.rel (0) target = $region21
  $region20: #{mlp_forward.1} parent=0 // pred_region
    _
  $region21: #{mlp_forward.1} parent=0 // pred_fallthru
    _
  // Predicated region
  $region22: #{mlp_forward.1} parent=0 // pred_check
    _
  $region23: #{mlp_forward.1} parent=0 // pred_check_branch
    %23 = sbr.rel (0) target = $region25
  $region24: #{mlp_forward.1} parent=0 // pred_region
    _
  $region25: #{mlp_forward.1} parent=0 // pred_fallthru
    _
  // Predicated region
  $region26: #{mlp_forward.1} parent=0 // pred_check
    _
  $region27: #{mlp_forward.1} parent=0 // pred_check_branch
    %25 = sbr.rel (0) target = $region29
  $region28: #{mlp_forward.1} parent=0 // pred_region
    _
  $region29: #{mlp_forward.1} parent=0 // pred_fallthru
    _
  %v27 = vld [vmem:[%s0] sm:$0xff]
  %v28 = vpack.c.bf16 %v27, %v27
  %v29 = vld [vmem:[%s1] sm:$0xff]
  %v30 = vld [vmem:[%s1 + $0x8] sm:$0xff]
  %v31 = vld [vmem:[%s1 + $0x10] sm:$0xff]
  %v32 = vld [vmem:[%s1 + $0x18] sm:$0xff]
  %v33 = vpack.c.bf16 %v30, %v29
  %v34 = vpack.c.bf16 %v32, %v31
  %v35 = vld [vmem:[%s2] sm:$0x1]
  %v37 = vlaneseq
  %v38 = vshrl.u32 %v37, 7
  %v39 = vsub.s32 0, %v38
  %v40 = vrot.slane %v35, %v39
  %vm42 = vcmask 261120
  %v44 = vsel %vm42, %v28, 0
  %46 = vmatprep.subr.bf16.mxu0 0
  %47 = vmatpush1.bf16.msra.mxu0 %v33
  %48 = vmatprep.subr.bf16.mxu0 0
  %49 = vmatpush1.bf16.msra.mxu0 %v34
  %50 = vmatprep.subr.bf16.mxu0 0
  %51 = vmatpush1.bf16.msra.mxu0 0
  %52 = vmatprep.subr.bf16.mxu0 0
  %53 = vmatpush1.bf16.msra.mxu0 0
  %54 = vmatprep.subr.bf16.mxu0 0
  %55 = vmatpush1.bf16.msra.mxu0 0
  %56 = vmatprep.subr.bf16.mxu0 0
  %57 = vmatpush1.bf16.msra.mxu0 0
  %58 = vmatprep.subr.bf16.mxu0 0
  %59 = vmatpush1.bf16.msra.mxu0 0
  %60 = vmatprep.subr.bf16.mxu0 0
  %61 = vmatpush1.bf16.msra.mxu0 0
  %62 = vmatprep.subr.bf16.mxu0 0
  %63 = vmatpush1.bf16.msra.mxu0 0
  %64 = vmatprep.subr.bf16.mxu0 0
  %65 = vmatpush1.bf16.msra.mxu0 0
  %66 = vmatprep.subr.bf16.mxu0 0
  %67 = vmatpush1.bf16.msra.mxu0 0
  %68 = vmatprep.subr.bf16.mxu0 0
  %69 = vmatpush1.bf16.msra.mxu0 0
  %70 = vmatprep.subr.bf16.mxu0 0
  %71 = vmatpush1.bf16.msra.mxu0 0
  %72 = vmatprep.subr.bf16.mxu0 0
  %73 = vmatpush1.bf16.msra.mxu0 0
  %74 = vmatprep.subr.bf16.mxu0 0
  %75 = vmatpush1.bf16.msra.mxu0 0
  %76 = vmatprep.subr.bf16.mxu0 0
  %77 = vmatpush1.bf16.msra.mxu0 0
  %78 = vmatprep.mubr.bf16.mxu0 0
  %79 = vmatmul.mubr.bf16.gmra.mrb[0].mxu0 %v44
  %v80 = vpop.f32.mrb[0].mxu0
  %v81 = vadd.f32 %v40, %v80
  %v82 = vpop.f32.mrb[0].mxu0
  %v83 = vpop.f32.mrb[0].mxu0
  %v84 = vpop.f32.mrb[0].mxu0
  %85 = vdwg.mxu0
  %v86 = vmax.f32 %v81, 0.0
  %v87 = vpack.c.bf16 %v86, %v86
  %v88 = vld [vmem:[%s3] sm:$0xff]
  %v89 = vld [vmem:[%s3 + $0x8] sm:$0xff]
  %v90 = vld [vmem:[%s3 + $0x10] sm:$0xff]
  %v91 = vld [vmem:[%s3 + $0x18] sm:$0xff]
  %v92 = vld [vmem:[%s3 + $0x20] sm:$0xff]
  %v93 = vld [vmem:[%s3 + $0x28] sm:$0xff]
  %v94 = vld [vmem:[%s3 + $0x30] sm:$0xff]
  %v95 = vld [vmem:[%s3 + $0x38] sm:$0xff]
  %v96 = vpack.c.bf16 %v89, %v88
  %v97 = vpack.c.bf16 %v91, %v90
  %v98 = vpack.c.bf16 %v93, %v92
  %v99 = vpack.c.bf16 %v95, %v94
  %v100 = vld [vmem:[%s4] sm:$0x1]
  %v102 = vlaneseq
  %v103 = vshrl.u32 %v102, 7
  %v104 = vsub.s32 0, %v103
  %v105 = vrot.slane %v100, %v104
  %vm107 = vcmask 523264
  %v109 = vsel %vm107, %v87, 0
  %111 = vmatprep.subr.bf16.mxu0 0
  %112 = vmatpush1.bf16.msra.mxu0 %v96
  %113 = vmatprep.subr.bf16.mxu0 0
  %114 = vmatpush1.bf16.msra.mxu0 %v97
  %115 = vmatprep.subr.bf16.mxu0 0
  %116 = vmatpush1.bf16.msra.mxu0 %v98
  %117 = vmatprep.subr.bf16.mxu0 0
  %118 = vmatpush1.bf16.msra.mxu0 %v99
  %119 = vmatprep.subr.bf16.mxu0 0
  %120 = vmatpush1.bf16.msra.mxu0 0
  %121 = vmatprep.subr.bf16.mxu0 0
  %122 = vmatpush1.bf16.msra.mxu0 0
  %123 = vmatprep.subr.bf16.mxu0 0
  %124 = vmatpush1.bf16.msra.mxu0 0
  %125 = vmatprep.subr.bf16.mxu0 0
  %126 = vmatpush1.bf16.msra.mxu0 0
  %127 = vmatprep.subr.bf16.mxu0 0
  %128 = vmatpush1.bf16.msra.mxu0 0
  %129 = vmatprep.subr.bf16.mxu0 0
  %130 = vmatpush1.bf16.msra.mxu0 0
  %131 = vmatprep.subr.bf16.mxu0 0
  %132 = vmatpush1.bf16.msra.mxu0 0
  %133 = vmatprep.subr.bf16.mxu0 0
  %134 = vmatpush1.bf16.msra.mxu0 0
  %135 = vmatprep.subr.bf16.mxu0 0
  %136 = vmatpush1.bf16.msra.mxu0 0
  %137 = vmatprep.subr.bf16.mxu0 0
  %138 = vmatpush1.bf16.msra.mxu0 0
  %139 = vmatprep.subr.bf16.mxu0 0
  %140 = vmatpush1.bf16.msra.mxu0 0
  %141 = vmatprep.subr.bf16.mxu0 0
  %142 = vmatpush1.bf16.msra.mxu0 0
  %143 = vmatprep.mubr.bf16.mxu0 0
  %144 = vmatmul.mubr.bf16.gmra.mrb[0].mxu0 %v109
  %v145 = vpop.f32.mrb[0].mxu0
  %v146 = vadd.f32 %v105, %v145
  %v147 = vpop.f32.mrb[0].mxu0
  %v148 = vpop.f32.mrb[0].mxu0
  %v149 = vpop.f32.mrb[0].mxu0
  %150 = vdwg.mxu0
  %v151 = vmax.f32 %v146, 0.0
  %v152 = vpack.c.bf16 %v151, %v151
  %v153 = vld [vmem:[%s5] sm:$0xff]
  %v154 = vld [vmem:[%s5 + $0x8] sm:$0xff]
  %v155 = vld [vmem:[%s5 + $0x10] sm:$0xff]
  %v156 = vld [vmem:[%s5 + $0x18] sm:$0xff]
  %v157 = vld [vmem:[%s5 + $0x20] sm:$0xff]
  %v158 = vld [vmem:[%s5 + $0x28] sm:$0xff]
  %v159 = vld [vmem:[%s5 + $0x30] sm:$0xff]
  %v160 = vld [vmem:[%s5 + $0x38] sm:$0xff]
  %v161 = vpack.c.bf16 %v154, %v153
  %v162 = vpack.c.bf16 %v156, %v155
  %v163 = vpack.c.bf16 %v158, %v157
  %v164 = vpack.c.bf16 %v160, %v159
  %v165 = vld [vmem:[%s6] sm:$0x1]
  %v167 = vlaneseq
  %v168 = vshrl.u32 %v167, 7
  %v169 = vsub.s32 0, %v168
  %v170 = vrot.slane %v165, %v169
  %v173 = vsel %vm107, %v152, 0
  %175 = vmatprep.subr.bf16.mxu0 0
  %176 = vmatpush1.bf16.msra.mxu0 %v161
  %177 = vmatprep.subr.bf16.mxu0 0
  %178 = vmatpush1.bf16.msra.mxu0 %v162
  %179 = vmatprep.subr.bf16.mxu0 0
  %180 = vmatpush1.bf16.msra.mxu0 %v163
  %181 = vmatprep.subr.bf16.mxu0 0
  %182 = vmatpush1.bf16.msra.mxu0 %v164
  %183 = vmatprep.subr.bf16.mxu0 0
  %184 = vmatpush1.bf16.msra.mxu0 0
  %185 = vmatprep.subr.bf16.mxu0 0
  %186 = vmatpush1.bf16.msra.mxu0 0
  %187 = vmatprep.subr.bf16.mxu0 0
  %188 = vmatpush1.bf16.msra.mxu0 0
  %189 = vmatprep.subr.bf16.mxu0 0
  %190 = vmatpush1.bf16.msra.mxu0 0
  %191 = vmatprep.subr.bf16.mxu0 0
  %192 = vmatpush1.bf16.msra.mxu0 0
  %193 = vmatprep.subr.bf16.mxu0 0
  %194 = vmatpush1.bf16.msra.mxu0 0
  %195 = vmatprep.subr.bf16.mxu0 0
  %196 = vmatpush1.bf16.msra.mxu0 0
  %197 = vmatprep.subr.bf16.mxu0 0
  %198 = vmatpush1.bf16.msra.mxu0 0
  %199 = vmatprep.subr.bf16.mxu0 0
  %200 = vmatpush1.bf16.msra.mxu0 0
  %201 = vmatprep.subr.bf16.mxu0 0
  %202 = vmatpush1.bf16.msra.mxu0 0
  %203 = vmatprep.subr.bf16.mxu0 0
  %204 = vmatpush1.bf16.msra.mxu0 0
  %205 = vmatprep.subr.bf16.mxu0 0
  %206 = vmatpush1.bf16.msra.mxu0 0
  %207 = vmatprep.mubr.bf16.mxu0 0
  %208 = vmatmul.mubr.bf16.gmra.mrb[0].mxu0 %v173
  %v209 = vpop.f32.mrb[0].mxu0
  %v210 = vadd.f32 %v170, %v209
  %v211 = vpop.f32.mrb[0].mxu0
  %v212 = vpop.f32.mrb[0].mxu0
  %v213 = vpop.f32.mrb[0].mxu0
  %214 = vdwg.mxu0
  %215 = vst [vmem:[%s7] sm:$0xff] %v210
  // Predicated region
  $region30: #{mlp_forward.1} parent=0 // pred_check
    _
  $region31: #{mlp_forward.1} parent=0 // pred_check_branch
    %217 = sbr.rel (0) target = $region33
  $region32: #{mlp_forward.1} parent=0 // pred_region
    _
  $region33: #{mlp_forward.1} parent=0 // pred_fallthru
    _
  // Predicated region
  $region34: #{mlp_forward.1} parent=0 // pred_check
    _
  $region35: #{mlp_forward.1} parent=0 // pred_check_branch
    %219 = sbr.rel (0) target = $region37
  $region36: #{mlp_forward.1} parent=0 // pred_region
    _
  $region37: #{mlp_forward.1} parent=0 // pred_fallthru
    _

</llo_original>
